<compile_context>
chip_gen: v5e
topology: v5e:2x2
jax: 0.10.0
libtpu: 0.0.40
codegen_flags: <defaults>
</compile_context>

<pallas_src>
import numpy as np
import jax
import jax.numpy as jnp
from jax.experimental import pallas as pl

# ---- Model config (mirrors MMOE_SDSP.__init__ with small synthetic sizes) ----
DOMAIN_NUM = 2
N_EXPERT = [2, 3]                   # experts per domain
E_TOTAL = sum(N_EXPERT)             # 5
N_FEATURES = 4
EMBED_DIM = 16
INPUT_DIM = N_FEATURES * EMBED_DIM  # 64
H = 32                              # expert_params["dims"][-1]
T = 16                              # tower_params["dims"][-1]
VOCAB = 50
BATCH = 16

# ---- Fused-layout constants (all section offsets are multiples of 128) ------
EH = E_TOTAL * H                    # 160: one domain's expert slab width
EXP_N = DOMAIN_NUM * EH             # 320: duplicated expert slab width
GATE_OFF = 384                      # gate-logit block offset in h (>= EXP_N, mult of 128)
GATE_W = 16                         # padded gate block width (real gates: D*E = 10)
W1_N = GATE_OFF + GATE_W            # 400: fused first-layer output width
DEN_OFF = 384                       # denominator block offset in gsel output (mult of 128)
GSEL_N = DEN_OFF + EXP_N            # 704
TB1_OFF = 512                       # tower-1 bias offset in the bias row (mult of 128)
TB2_OFF = 640                       # tower-2 bias offset in the bias row (mult of 128)
BIAS_N = TB2_OFF + DOMAIN_NUM       # 642

assert DOMAIN_NUM * E_TOTAL <= GATE_W
assert GATE_OFF >= EXP_N and GATE_OFF % 128 == 0
assert DEN_OFF >= EXP_N and DEN_OFF % 128 == 0
assert TB1_OFF >= W1_N and TB2_OFF >= TB1_OFF + DOMAIN_NUM * T


# --------------------------- Pallas kernel ---------------------------------
def mmoe_kernel(x_ref, dom_ref, w1_ref, gsel_ref, tower_ref, bias_ref, out_ref):
    x = x_ref[...]                                   # (B, 64) bf16
    dom = dom_ref[...]                               # (B, 1) int32

    # One fused MXU call: per-domain-duplicated expert pre-activations + gate logits.
    h = (jnp.dot(x, w1_ref[...], preferred_element_type=jnp.float32)
         + bias_ref[:, 0:W1_N])                      # (B, 400) f32
    slab = jnp.maximum(h[:, 0:EXP_N], 0.0)           # (B, 320) relu'd experts, already tiled per domain

    # Joint softmax over all gate logits: one row max (padded cols are 0-weight,
    # harmless since softmax is shift-invariant and denominators only read real
    # gate rows), one exp, then expansion + per-domain denominator in ONE matmul.
    glog = h[:, GATE_OFF:GATE_OFF + GATE_W]          # (B, 16) f32
    m = jnp.max(glog, axis=1, keepdims=True)         # (B, 1)
    p = jnp.exp(glog - m).astype(jnp.bfloat16)       # (B, 16)
    r = jnp.dot(p, gsel_ref[...], preferred_element_type=jnp.float32)   # (B, 704) f32
    gate = r[:, 0:EXP_N] / r[:, DEN_OFF:DEN_OFF + EXP_N]                # (B, 320) normalized, exact

    weighted = (gate * slab).astype(jnp.bfloat16)    # (B, 320)

    # Fused block-diagonal towers; the expert-group reduction is folded into the
    # vertically tiled tower-1 rows.
    t = jnp.maximum(
        jnp.dot(weighted, tower_ref[0:EXP_N, :], preferred_element_type=jnp.float32)
        + bias_ref[:, TB1_OFF:TB1_OFF + DOMAIN_NUM * T], 0.0)           # (B, 32) f32
    y = jax.nn.sigmoid(
        jnp.dot(t.astype(jnp.bfloat16),
                tower_ref[EXP_N:EXP_N + DOMAIN_NUM * T, 0:DOMAIN_NUM],
                preferred_element_type=jnp.float32)
        + bias_ref[:, TB2_OFF:TB2_OFF + DOMAIN_NUM])                    # (B, D) f32

    # Per-sample domain routing: pure-VPU select chain.
    out = y[:, 0:1]
    for d in range(1, DOMAIN_NUM):
        out = jnp.where(dom == d, y[:, d:d + 1], out)
    out_ref[...] = out                               # (B, 1)


# --------------------------- fused parameter layout --------------------------
def fuse_params(p):
    ew = np.asarray(p["ew"], np.float32); eb = np.asarray(p["eb"], np.float32)
    gw = np.asarray(p["gw"], np.float32); gb = np.asarray(p["gb"], np.float32)
    tw1 = np.asarray(p["tw1"], np.float32); tb1 = np.asarray(p["tb1"], np.float32)
    tw2 = np.asarray(p["tw2"], np.float32); tb2 = np.asarray(p["tb2"], np.float32)

    # Fused first-layer RHS: [experts tiled per domain | pad | gates | pad].
    w1 = np.zeros((INPUT_DIM, W1_N), np.float32)
    b1 = np.zeros((1, W1_N), np.float32)
    exp_w = np.concatenate([ew[e] for e in range(E_TOTAL)], axis=1)    # (64, 160)
    exp_b = np.concatenate([eb[e] for e in range(E_TOTAL)], axis=1)    # (1, 160)
    for d in range(DOMAIN_NUM):
        w1[:, d * EH:(d + 1) * EH] = exp_w
        b1[:, d * EH:(d + 1) * EH] = exp_b
        w1[:, GATE_OFF + d * E_TOTAL:GATE_OFF + (d + 1) * E_TOTAL] = gw[d]
        b1[:, GATE_OFF + d * E_TOTAL:GATE_OFF + (d + 1) * E_TOTAL] = gb[d]

    # Gate expansion / normalization slab:
    #   cols [0, EXP_N):             broadcast gate (d,e) over expert e's H lanes
    #   cols [DEN_OFF, DEN_OFF+EXP_N): per-domain group-sum (softmax denominator)
    gsel = np.zeros((GATE_W, GSEL_N), np.float32)
    for d in range(DOMAIN_NUM):
        for e in range(E_TOTAL):
            row = d * E_TOTAL + e
            gsel[row, d * EH + e * H: d * EH + (e + 1) * H] = 1.0
            gsel[row, DEN_OFF + d * EH: DEN_OFF + (d + 1) * EH] = 1.0

    # Tower slab: rows [0, EXP_N) = block-diag tower-1 (each block vertically
    # tiled E_TOTAL times); rows [EXP_N, EXP_N+D*T) = block-diag tower-2
    # (real output columns [0, DOMAIN_NUM)).
    tower = np.zeros((EXP_N + DOMAIN_NUM * T, DOMAIN_NUM * T), np.float32)
    for d in range(DOMAIN_NUM):
        tower[d * EH:(d + 1) * EH, d * T:(d + 1) * T] = np.concatenate([tw1[d]] * E_TOTAL, axis=0)
        tower[EXP_N + d * T:EXP_N + (d + 1) * T, d] = tw2[d][:, 0]

    # One f32 bias row: b1 | tb1 | tb2 at 128-aligned lane offsets.
    biases = np.zeros((1, BIAS_N), np.float32)
    biases[:, :W1_N] = b1
    for d in range(DOMAIN_NUM):
        biases[:, TB1_OFF + d * T:TB1_OFF + (d + 1) * T] = tb1[d]
        biases[0, TB2_OFF + d] = tb2[d][0, 0]

    return (jnp.asarray(w1, jnp.bfloat16), jnp.asarray(gsel, jnp.bfloat16),
            jnp.asarray(tower, jnp.bfloat16), jnp.asarray(biases, jnp.float32))


# --------------------------- wrapper ----------------------------------------
def embedding_layer(feat_ids, emb_tables):
    # EmbeddingLayer(..., squeeze_dim=True): concat per-feature embeddings.
    cols = [emb_tables[f][feat_ids[:, f]] for f in range(N_FEATURES)]
    return jnp.concatenate(cols, axis=-1)                        # (B, INPUT_DIM)


def build_forward(params):
    """fuse_params() runs exactly once; the returned callable is jitted."""
    w1, gsel, tower, biases = fuse_params(params)
    emb_tables = params["emb_tables"]

    @jax.jit
    def forward(feat_ids, domain_id):
        embed_x = embedding_layer(feat_ids, emb_tables)          # (B, 64) f32
        dom2 = domain_id.reshape(-1, 1).astype(jnp.int32)        # (B, 1)
        out = pl.pallas_call(
            mmoe_kernel,
            out_shape=jax.ShapeDtypeStruct((embed_x.shape[0], 1), jnp.float32),
        )(embed_x.astype(jnp.bfloat16), dom2, w1, gsel, tower, biases)
        return out[:, 0]                                         # final.squeeze(1)

    return forward


# --------------------------- params / reference ------------------------------
def init_params(key):
    ks = jax.random.split(key, 9)
    s = 0.1
    return dict(
        emb_tables=s * jax.random.normal(ks[0], (N_FEATURES, VOCAB, EMBED_DIM), jnp.float32),
        ew=s * jax.random.normal(ks[1], (E_TOTAL, INPUT_DIM, H), jnp.float32),
        eb=s * jax.random.normal(ks[2], (E_TOTAL, 1, H), jnp.float32),
        gw=s * jax.random.normal(ks[3], (DOMAIN_NUM, INPUT_DIM, E_TOTAL), jnp.float32),
        gb=s * jax.random.normal(ks[4], (DOMAIN_NUM, 1, E_TOTAL), jnp.float32),
        tw1=s * jax.random.normal(ks[5], (DOMAIN_NUM, H, T), jnp.float32),
        tb1=s * jax.random.normal(ks[6], (DOMAIN_NUM, 1, T), jnp.float32),
        tw2=s * jax.random.normal(ks[7], (DOMAIN_NUM, T, 1), jnp.float32),
        tb2=s * jax.random.normal(ks[8], (DOMAIN_NUM, 1, 1), jnp.float32),
    )


def reference_forward(embed_x, domain_id, p):
    # Unfused pure-JAX f32 reference mirroring the PyTorch eval forward.
    x = embed_x
    experts = [jax.nn.relu(x @ p["ew"][e] + p["eb"][e][0]) for e in range(E_TOTAL)]
    experts = jnp.stack(experts, axis=1)                         # (B, E, H)
    final = jnp.zeros((x.shape[0], 1), jnp.float32)
    for d in range(DOMAIN_NUM):
        gate = jax.nn.softmax(x @ p["gw"][d] + p["gb"][d][0], axis=1)
        emb = jnp.sum(gate[:, :, None] * experts, axis=1)
        t = jax.nn.relu(emb @ p["tw1"][d] + p["tb1"][d][0])
        y = jax.nn.sigmoid(t @ p["tw2"][d] + p["tb2"][d][0])
        final = jnp.where((domain_id == d)[:, None], y, final)
    return final[:, 0]


if __name__ == "__main__":
    key = jax.random.PRNGKey(0)
    kp, kid, kdom = jax.random.split(key, 3)

    params = init_params(kp)
    feat_ids = jax.random.randint(kid, (BATCH, N_FEATURES), 0, VOCAB)     # sparse features
    domain_id = jax.random.randint(kdom, (BATCH,), 0, DOMAIN_NUM)         # x['domain_indicator']

    fwd = build_forward(params)
    out = jax.block_until_ready(fwd(feat_ids, domain_id))

    embed_x = embedding_layer(feat_ids, params["emb_tables"])             # (B, 64)
    ref = reference_forward(embed_x, domain_id, params)

    assert out.shape == (BATCH,)
    # bf16 MXU operands vs f32 reference -> allow a small tolerance.
    assert jnp.allclose(out, ref, atol=2e-3, rtol=2e-3), (
        np.asarray(out), np.asarray(ref), float(jnp.max(jnp.abs(out - ref))))
    print("KERNEL_OK")
</pallas_src>

<mosaic_0001>
module attributes {stable_mosaic.version = 11 : i64} {
  func.func @mmoe_kernel(%arg0: memref<16x64xbf16, #tpu.memory_space<vmem>>, %arg1: memref<16x1xi32, #tpu.memory_space<vmem>>, %arg2: memref<64x400xbf16, #tpu.memory_space<vmem>>, %arg3: memref<16x704xbf16, #tpu.memory_space<vmem>>, %arg4: memref<352x32xbf16, #tpu.memory_space<vmem>>, %arg5: memref<1x642xf32, #tpu.memory_space<vmem>>, %arg6: memref<16x1xf32, #tpu.memory_space<vmem>>) attributes {dimension_semantics = [], scalar_prefetch = 0 : i64, scratch_operands = 0 : i64, tpu.core_type = #tpu.core_type<tc>} {
    %c0 = arith.constant 0 : index
    %c0_0 = arith.constant 0 : index
    %0 = vector.load %arg0[%c0, %c0_0] : memref<16x64xbf16, #tpu.memory_space<vmem>>, vector<16x64xbf16>
    %c0_1 = arith.constant 0 : index
    %c0_2 = arith.constant 0 : index
    %1 = vector.load %arg1[%c0_1, %c0_2] : memref<16x1xi32, #tpu.memory_space<vmem>>, vector<16x1xi32>
    %c0_3 = arith.constant 0 : index
    %c0_4 = arith.constant 0 : index
    %2 = vector.load %arg2[%c0_3, %c0_4] : memref<64x400xbf16, #tpu.memory_space<vmem>>, vector<64x400xbf16>
    %cst = arith.constant dense<0.000000e+00> : vector<16x400xf32>
    %3 = tpu.matmul %0, %2, %cst {dimension_numbers = #tpu.dot_dimension_numbers<[1], [0], [0], [1], [0, 0, 1, 1], [], []>} : vector<16x64xbf16>, vector<64x400xbf16>, vector<16x400xf32> -> vector<16x400xf32>
    %c0_5 = arith.constant 0 : index
    %c0_6 = arith.constant 0 : index
    %4 = vector.load %arg5[%c0_5, %c0_6] : memref<1x642xf32, #tpu.memory_space<vmem>>, vector<1x400xf32>
    %5 = vector.broadcast %4 : vector<1x400xf32> to vector<16x400xf32>
    %6 = arith.addf %3, %5 : vector<16x400xf32>
    %7 = vector.extract_strided_slice %6 {offsets = [0, 0], sizes = [16, 320], strides = [1, 1]} : vector<16x400xf32> to vector<16x320xf32>
    %cst_7 = arith.constant 0.000000e+00 : f32
    %8 = vector.broadcast %cst_7 : f32 to vector<16x320xf32>
    %9 = arith.maximumf %7, %8 : vector<16x320xf32>
    %10 = vector.extract_strided_slice %6 {offsets = [0, 384], sizes = [16, 16], strides = [1, 1]} : vector<16x400xf32> to vector<16x16xf32>
    %cst_8 = arith.constant dense<0xFF800000> : vector<16xf32>
    %11 = vector.multi_reduction <maximumf>, %10, %cst_8 [1] : vector<16x16xf32> to vector<16xf32>
    %12 = vector.shape_cast %11 : vector<16xf32> to vector<16x1xf32>
    %13 = vector.broadcast %12 : vector<16x1xf32> to vector<16x16xf32>
    %14 = arith.subf %10, %13 : vector<16x16xf32>
    %15 = math.exp %14 : vector<16x16xf32>
    %16 = arith.truncf %15 : vector<16x16xf32> to vector<16x16xbf16>
    %c0_9 = arith.constant 0 : index
    %c0_10 = arith.constant 0 : index
    %17 = vector.load %arg3[%c0_9, %c0_10] : memref<16x704xbf16, #tpu.memory_space<vmem>>, vector<16x704xbf16>
    %cst_11 = arith.constant dense<0.000000e+00> : vector<16x704xf32>
    %18 = tpu.matmul %16, %17, %cst_11 {dimension_numbers = #tpu.dot_dimension_numbers<[1], [0], [0], [1], [0, 0, 1, 1], [], []>} : vector<16x16xbf16>, vector<16x704xbf16>, vector<16x704xf32> -> vector<16x704xf32>
    %19 = vector.extract_strided_slice %18 {offsets = [0, 0], sizes = [16, 320], strides = [1, 1]} : vector<16x704xf32> to vector<16x320xf32>
    %20 = vector.extract_strided_slice %18 {offsets = [0, 384], sizes = [16, 320], strides = [1, 1]} : vector<16x704xf32> to vector<16x320xf32>
    %21 = arith.divf %19, %20 : vector<16x320xf32>
    %22 = arith.mulf %21, %9 : vector<16x320xf32>
    %23 = arith.truncf %22 : vector<16x320xf32> to vector<16x320xbf16>
    %c0_12 = arith.constant 0 : index
    %c0_13 = arith.constant 0 : index
    %24 = vector.load %arg4[%c0_12, %c0_13] : memref<352x32xbf16, #tpu.memory_space<vmem>>, vector<320x32xbf16>
    %cst_14 = arith.constant dense<0.000000e+00> : vector<16x32xf32>
    %25 = tpu.matmul %23, %24, %cst_14 {dimension_numbers = #tpu.dot_dimension_numbers<[1], [0], [0], [1], [0, 0, 1, 1], [], []>} : vector<16x320xbf16>, vector<320x32xbf16>, vector<16x32xf32> -> vector<16x32xf32>
    %c0_15 = arith.constant 0 : index
    %c512 = arith.constant 512 : index
    %26 = vector.load %arg5[%c0_15, %c512] : memref<1x642xf32, #tpu.memory_space<vmem>>, vector<1x32xf32>
    %27 = vector.broadcast %26 : vector<1x32xf32> to vector<16x32xf32>
    %28 = arith.addf %25, %27 : vector<16x32xf32>
    %cst_16 = arith.constant 0.000000e+00 : f32
    %29 = vector.broadcast %cst_16 : f32 to vector<16x32xf32>
    %30 = arith.maximumf %28, %29 : vector<16x32xf32>
    %31 = arith.truncf %30 : vector<16x32xf32> to vector<16x32xbf16>
    %c320 = arith.constant 320 : index
    %c0_17 = arith.constant 0 : index
    %32 = vector.load %arg4[%c320, %c0_17] : memref<352x32xbf16, #tpu.memory_space<vmem>>, vector<32x2xbf16>
    %cst_18 = arith.constant dense<0.000000e+00> : vector<16x2xf32>
    %33 = tpu.matmul %31, %32, %cst_18 {dimension_numbers = #tpu.dot_dimension_numbers<[1], [0], [0], [1], [0, 0, 1, 1], [], []>} : vector<16x32xbf16>, vector<32x2xbf16>, vector<16x2xf32> -> vector<16x2xf32>
    %c0_19 = arith.constant 0 : index
    %c640 = arith.constant 640 : index
    %34 = vector.load %arg5[%c0_19, %c640] : memref<1x642xf32, #tpu.memory_space<vmem>>, vector<1x2xf32>
    %35 = vector.broadcast %34 : vector<1x2xf32> to vector<16x2xf32>
    %36 = arith.addf %33, %35 : vector<16x2xf32>
    %37 = arith.negf %36 : vector<16x2xf32>
    %38 = math.exp %37 : vector<16x2xf32>
    %cst_20 = arith.constant 1.000000e+00 : f32
    %39 = vector.broadcast %cst_20 : f32 to vector<16x2xf32>
    %40 = arith.addf %39, %38 : vector<16x2xf32>
    %41 = arith.divf %39, %40 : vector<16x2xf32>
    %42 = vector.extract_strided_slice %41 {offsets = [0, 0], sizes = [16, 1], strides = [1, 1]} : vector<16x2xf32> to vector<16x1xf32>
    %c1_i32 = arith.constant 1 : i32
    %43 = vector.broadcast %c1_i32 : i32 to vector<16x1xi32>
    %44 = arith.cmpi eq, %1, %43 : vector<16x1xi32>
    %45 = vector.extract_strided_slice %41 {offsets = [0, 1], sizes = [16, 1], strides = [1, 1]} : vector<16x2xf32> to vector<16x1xf32>
    %46 = arith.select %44, %45, %42 : vector<16x1xi1>, vector<16x1xf32>
    %c0_21 = arith.constant 0 : index
    %c0_22 = arith.constant 0 : index
    %47 = vector.load %arg6[%c0_21, %c0_22] : memref<16x1xf32, #tpu.memory_space<vmem>>, vector<16x1xf32>
    tpu.vector_store %arg6[%c0_21, %c0_22], %46 {strides = array<i32>} : memref<16x1xf32, #tpu.memory_space<vmem>>, vector<16x1xf32>,
    return
  }
}

</mosaic_0001>

<llo_original>
// kernel: forward.1
$region0: #{forward.1}
  #allocation0 [shape = 'u32[]', space=smem, size = 0x4, offset = 0x4, fixed_abs, tag = 'smem constant byte address 0x4 - core index']
  #allocation1 [shape = 'u32[72,128]{1,0:T(1,128)}', space=vmem, size = 0x9000, scoped, tag = 'internal scratch']
  %s0 = inlined_call_operand.vmem [shape: bf16[16,64], index: 0, kind: input, shape index: {}]
  %s1 = inlined_call_operand.vmem [shape: s32[16,1], index: 1, kind: input, shape index: {}]
  %s2 = inlined_call_operand.vmem [shape: bf16[64,400], index: 2, kind: input, shape index: {}]
  %s3 = inlined_call_operand.vmem [shape: bf16[16,704], index: 3, kind: input, shape index: {}]
  %s4 = inlined_call_operand.hbm [shape: bf16[352,32], index: 4, kind: input, shape index: {}]
  %s5 = inlined_call_operand.vmem [shape: f32[1,642], index: 5, kind: input, shape index: {}]
  %s6 = inlined_call_operand.vmem [shape: f32[16,1], index: 6, kind: output, shape index: {}]
  %s7 = sld [smem:[#allocation0]]
  $region38: #{forward.1} parent=0
    _
  %s9 = ssub.s32 1, %s7
  %s10 = scalar_select 0, %s9, %s7
  $region1: #{forward.1} parent=0
    #allocation2 [shape = 'u8[90112]{0}', space=vmem, size = 0x16000, scoped, tag = 'input window, operand 4, single buffered']
    #allocation3 [shape = 's32[1]{0}', space=sflag, size = 0x4, scoped, tag = 'scoped memory for forward.1']
    %11 = vsyncpa [#allocation3], 0
    // Predicated region
    $region2: #{forward.1} parent=1 // pred_check
      _
    $region3: #{forward.1} parent=1 // pred_check_branch
      %13 = sbr.rel (0) target = $region5
    $region4: #{forward.1} parent=1 // pred_region
      _
    $region5: #{forward.1} parent=1 // pred_fallthru
      _
    // Predicated region
    $region6: #{forward.1} parent=1 // pred_check
      _
    $region7: #{forward.1} parent=1 // pred_check_branch
      %15 = sbr.rel (0) target = $region9
    $region8: #{forward.1} parent=1 // pred_region
      _
    $region9: #{forward.1} parent=1 // pred_fallthru
      _
    // Predicated region
    $region10: #{forward.1} parent=1 // pred_check
      _
    $region11: #{forward.1} parent=1 // pred_check_branch
      %17 = sbr.rel (0) target = $region13
    $region12: #{forward.1} parent=1 // pred_region
      _
    $region13: #{forward.1} parent=1 // pred_fallthru
      _
    // Predicated region
    $region14: #{forward.1} parent=1 // pred_check
      _
    $region15: #{forward.1} parent=1 // pred_check_branch
      %19 = sbr.rel (0) target = $region17
    $region16: #{forward.1} parent=1 // pred_region
      _
    $region17: #{forward.1} parent=1 // pred_fallthru
      _
    // Predicated region
    $region18: #{forward.1} parent=1 // pred_check
      _
    $region19: #{forward.1} parent=1 // pred_check_branch
      %21 = sbr.rel (0) target = $region21
    $region20: #{forward.1} parent=1 // pred_region
      %23 = vsyncadd [#allocation3], 0
      %s24 = sshll.u32 %s4, 4
      %s25 = int_to_ptr.hbm [resolvable:$true] %s24
      %s26 = sshll.u32 [#allocation2], 4
      %s27 = int_to_ptr.vmem [resolvable:$true] %s26
      %32 = dma.hbm_to_vmem [thread:$0]  %s25, 2816, %s27, [#allocation3], 64, 64, 4
    $region21: #{forward.1} parent=1 // pred_fallthru
      _
    // Predicated region
    $region22: #{forward.1} parent=1 // pred_check
      _
    $region23: #{forward.1} parent=1 // pred_check_branch
      %34 = sbr.rel (0) target = $region25
    $region24: #{forward.1} parent=1 // pred_region
      _
    $region25: #{forward.1} parent=1 // pred_fallthru
      _
    // Predicated region
    $region26: #{forward.1} parent=1 // pred_check
      _
    $region27: #{forward.1} parent=1 // pred_check_branch
      %36 = sbr.rel (0) target = $region29
    $region28: #{forward.1} parent=1 // pred_region
      %38 = dma.done [#allocation3], 2816
    $region29: #{forward.1} parent=1 // pred_fallthru
      _
    %v40 = vld [vmem:[%s0] sm:$0xf]
    %v41 = vld [vmem:[%s0 + $0x4] sm:$0xf]
    %v42 = vld [vmem:[%s1] sm:$0xff]
    %v43 = vld [vmem:[%s1 + $0x8] sm:$0xff]
    %v44 = vld [vmem:[%s2] sm:$0xff]
    %v45 = vld [vmem:[%s2 + $0x8] sm:$0xff]
    %v46 = vld [vmem:[%s2 + $0x10] sm:$0xff]
    %v47 = vld [vmem:[%s2 + $0x18] sm:$0xff]
    %v48 = vld [vmem:[%s2 + $0x20] sm:$0xff]
    %v49 = vld [vmem:[%s2 + $0x28] sm:$0xff]
    %v50 = vld [vmem:[%s2 + $0x30] sm:$0xff]
    %v51 = vld [vmem:[%s2 + $0x38] sm:$0xff]
    %v52 = vld [vmem:[%s2 + $0x40] sm:$0xff]
    %v53 = vld [vmem:[%s2 + $0x48] sm:$0xff]
    %v54 = vld [vmem:[%s2 + $0x50] sm:$0xff]
    %v55 = vld [vmem:[%s2 + $0x58] sm:$0xff]
    %v56 = vld [vmem:[%s2 + $0x60] sm:$0xff]
    %v57 = vld [vmem:[%s2 + $0x68] sm:$0xff]
    %v58 = vld [vmem:[%s2 + $0x70] sm:$0xff]
    %v59 = vld [vmem:[%s2 + $0x78] sm:$0xff]
    %v60 = vld [vmem:[%s5] sm:$0xf]
    %v62 = vperm.slane %v60, 0
    %v63 = vperm.slane %v60, 1
    %v64 = vperm.slane %v60, 2
    %v65 = vperm.slane %v60, 3
    %v72 = vunpack.c.l.b16 %v40
    %v73 = vunpack.c.l.b16 %v41
    %v74 = vpack.c.b16 %v73, %v72
    %v91 = vunpack.c.l.b16 %v44
    %v92 = vunpack.c.h.b16 %v44
    %v93 = vunpack.c.l.b16 %v45
    %v94 = vunpack.c.h.b16 %v45
    %v95 = vunpack.c.l.b16 %v46
    %v96 = vunpack.c.h.b16 %v46
    %v97 = vunpack.c.l.b16 %v47
    %v98 = vunpack.c.h.b16 %v47
    %v99 = vunpack.c.l.b16 %v48
    %v100 = vunpack.c.h.b16 %v48
    %v101 = vunpack.c.l.b16 %v49
    %v102 = vunpack.c.h.b16 %v49
    %v103 = vunpack.c.l.b16 %v50
    %v104 = vunpack.c.h.b16 %v50
    %v105 = vunpack.c.l.b16 %v51
    %v106 = vunpack.c.h.b16 %v51
    %v107 = vunpack.c.l.b16 %v52
    %v108 = vunpack.c.h.b16 %v52
    %v109 = vunpack.c.l.b16 %v53
    %v110 = vunpack.c.h.b16 %v53
    %v111 = vunpack.c.l.b16 %v54
    %v112 = vunpack.c.h.b16 %v54
    %v113 = vunpack.c.l.b16 %v55
    %v114 = vunpack.c.h.b16 %v55
    %v115 = vunpack.c.l.b16 %v56
    %v116 = vunpack.c.h.b16 %v56
    %v117 = vunpack.c.l.b16 %v57
    %v118 = vunpack.c.h.b16 %v57
    %v119 = vunpack.c.l.b16 %v58
    %v120 = vunpack.c.h.b16 %v58
    %v121 = vunpack.c.l.b16 %v59
    %v122 = vunpack.c.h.b16 %v59
    %v123 = vpack.c.b16 %v95, %v91
    %v124 = vpack.c.b16 %v96, %v92
    %v125 = vpack.c.b16 %v97, %v93
    %v126 = vpack.c.b16 %v98, %v94
    %v127 = vpack.c.b16 %v103, %v99
    %v128 = vpack.c.b16 %v104, %v100
    %v129 = vpack.c.b16 %v105, %v101
    %v130 = vpack.c.b16 %v106, %v102
    %v131 = vpack.c.b16 %v111, %v107
    %v132 = vpack.c.b16 %v112, %v108
    %v133 = vpack.c.b16 %v113, %v109
    %v134 = vpack.c.b16 %v114, %v110
    %v135 = vpack.c.b16 %v119, %v115
    %v136 = vpack.c.b16 %v120, %v116
    %v137 = vpack.c.b16 %v121, %v117
    %v138 = vpack.c.b16 %v122, %v118
    %vm155 = vcmask 523264
    %v157 = vsel %vm155, %v74, 0
    %159 = vmatpush.bf16.msra.mxu0 0
    %160 = vmatpush.bf16.msra.mxu0 0
    %161 = vmatpush.bf16.msra.mxu0 0
    %162 = vmatpush.bf16.msra.mxu0 0
    %163 = vmatpush.bf16.msra.mxu0 %v135
    %164 = vmatpush.bf16.msra.mxu0 %v131
    %165 = vmatpush.bf16.msra.mxu0 %v127
    %166 = vmatpush.bf16.msra.mxu0 %v123
    %167 = vmatmul.bf16.gmra.mxu0 %v157
    %v168 = vpop.f32.mrf.mxu0
    %v169 = vadd.f32 %v62, %v168
    %v170 = vpop.f32.mrf.mxu0
    %v171 = vadd.f32 %v62, %v170
    %172 = vdwg.mxu0
    %173 = vmatpush.bf16.msra.mxu0 0
    %174 = vmatpush.bf16.msra.mxu0 0
    %175 = vmatpush.bf16.msra.mxu0 0
    %176 = vmatpush.bf16.msra.mxu0 0
    %177 = vmatpush.bf16.msra.mxu0 %v136
    %178 = vmatpush.bf16.msra.mxu0 %v132
    %179 = vmatpush.bf16.msra.mxu0 %v128
    %180 = vmatpush.bf16.msra.mxu0 %v124
    %181 = vmatmul.bf16.gmra.mxu0 %v157
    %v182 = vpop.f32.mrf.mxu0
    %v183 = vadd.f32 %v63, %v182
    %v184 = vpop.f32.mrf.mxu0
    %v185 = vadd.f32 %v63, %v184
    %186 = vdwg.mxu0
    %187 = vmatpush.bf16.msra.mxu0 0
    %188 = vmatpush.bf16.msra.mxu0 0
    %189 = vmatpush.bf16.msra.mxu0 0
    %190 = vmatpush.bf16.msra.mxu0 0
    %191 = vmatpush.bf16.msra.mxu0 %v137
    %192 = vmatpush.bf16.msra.mxu0 %v133
    %193 = vmatpush.bf16.msra.mxu0 %v129
    %194 = vmatpush.bf16.msra.mxu0 %v125
    %195 = vmatmul.bf16.gmra.mxu0 %v157
    %v196 = vpop.f32.mrf.mxu0
    %v197 = vadd.f32 %v64, %v196
    %v198 = vpop.f32.mrf.mxu0
    %v199 = vadd.f32 %v64, %v198
    %200 = vdwg.mxu0
    %201 = vmatpush.bf16.msra.mxu0 0
    %202 = vmatpush.bf16.msra.mxu0 0
    %203 = vmatpush.bf16.msra.mxu0 0
    %204 = vmatpush.bf16.msra.mxu0 0
    %205 = vmatpush.bf16.msra.mxu0 %v138
    %206 = vmatpush.bf16.msra.mxu0 %v134
    %207 = vmatpush.bf16.msra.mxu0 %v130
    %208 = vmatpush.bf16.msra.mxu0 %v126
    %209 = vmatmul.bf16.gmra.mxu0 %v157
    %v210 = vpop.f32.mrf.mxu0
    %v211 = vadd.f32 %v65, %v210
    %v212 = vpop.f32.mrf.mxu0
    %v213 = vadd.f32 %v65, %v212
    %214 = vdwg.mxu0
    %v215 = vmax.f32 %v169, 0.0
    %v216 = vmax.f32 %v183, 0.0
    %v217 = vmax.f32 %v197, 0.0
    %v218 = vmax.f32 %v171, 0.0
    %v219 = vmax.f32 %v185, 0.0
    %v220 = vmax.f32 %v199, 0.0
    %vm221 = vcmask 130048
    %v222 = vsel %vm221, %v211, -inf
    %223 = vmax.xlane.f32.xlu0 %v222
    %v224 = vpop.xlane.xlu0 %223
    %v225 = vsel %vm221, %v213, -inf
    %226 = vmax.xlane.f32.xlu0 %v225
    %v227 = vpop.xlane.xlu0 %226
    %v228 = vsub.f32 %v211, %v224
    %v229 = vsub.f32 %v213, %v227
    %v230 = vmul.f32 %v228, 1.442695
    %v231 = vpow.pop %v230
    %v232 = vmul.f32 %v229, 1.442695
    %v233 = vpow.pop %v232
    %v234 = vpack.c.bf16 %v233, %v231
    %v235 = vld [vmem:[%s3] sm:$0xff]
    %v236 = vld [vmem:[%s3 + $0x8] sm:$0xff]
    %v237 = vld [vmem:[%s3 + $0x10] sm:$0xff]
    %v238 = vld [vmem:[%s3 + $0x18] sm:$0xff]
    %v239 = vld [vmem:[%s3 + $0x20] sm:$0xff]
    %v240 = vld [vmem:[%s3 + $0x28] sm:$0xff]
    %v247 = vunpack.c.l.b16 %v235
    %v248 = vunpack.c.h.b16 %v235
    %v249 = vunpack.c.l.b16 %v236
    %v250 = vunpack.c.h.b16 %v236
    %v251 = vunpack.c.l.b16 %v237
    %v252 = vunpack.c.h.b16 %v237
    %v253 = vunpack.c.l.b16 %v238
    %v254 = vunpack.c.h.b16 %v238
    %v255 = vunpack.c.l.b16 %v239
    %v256 = vunpack.c.h.b16 %v239
    %v257 = vunpack.c.l.b16 %v240
    %v258 = vunpack.c.h.b16 %v240
    %v259 = vpack.c.b16 %v253, %v247
    %v260 = vpack.c.b16 %v254, %v248
    %v261 = vpack.c.b16 %v255, %v249
    %v262 = vpack.c.b16 %v256, %v250
    %v263 = vpack.c.b16 %v257, %v251
    %v264 = vpack.c.b16 %v258, %v252
    %v272 = vsel %vm221, %v234, 0
    %274 = vmatpush.bf16.msra.mxu0 0
    %275 = vmatpush.bf16.msra.mxu0 0
    %276 = vmatpush.bf16.msra.mxu0 0
    %277 = vmatpush.bf16.msra.mxu0 0
    %278 = vmatpush.bf16.msra.mxu0 0
    %279 = vmatpush.bf16.msra.mxu0 0
    %280 = vmatpush.bf16.msra.mxu0 0
    %281 = vmatpush.bf16.msra.mxu0 %v259
    %282 = vmatmul.bf16.gmra.mxu0 %v272
    %v283 = vpop.f32.mrf.mxu0
    %v284 = vadd.f32 0.0, %v283
    %v285 = vpop.f32.mrf.mxu0
    %v286 = vadd.f32 0.0, %v285
    %287 = vdwg.mxu0
    %288 = vmatpush.bf16.msra.mxu0 0
    %289 = vmatpush.bf16.msra.mxu0 0
    %290 = vmatpush.bf16.msra.mxu0 0
    %291 = vmatpush.bf16.msra.mxu0 0
    %292 = vmatpush.bf16.msra.mxu0 0
    %293 = vmatpush.bf16.msra.mxu0 0
    %294 = vmatpush.bf16.msra.mxu0 0
    %295 = vmatpush.bf16.msra.mxu0 %v260
    %296 = vmatmul.bf16.gmra.mxu0 %v272
    %v297 = vpop.f32.mrf.mxu0
    %v298 = vadd.f32 0.0, %v297
    %v299 = vpop.f32.mrf.mxu0
    %v300 = vadd.f32 0.0, %v299
    %301 = vdwg.mxu0
    %302 = vmatpush.bf16.msra.mxu0 0
    %303 = vmatpush.bf16.msra.mxu0 0
    %304 = vmatpush.bf16.msra.mxu0 0
    %305 = vmatpush.bf16.msra.mxu0 0
    %306 = vmatpush.bf16.msra.mxu0 0
    %307 = vmatpush.bf16.msra.mxu0 0
    %308 = vmatpush.bf16.msra.mxu0 0
    %309 = vmatpush.bf16.msra.mxu0 %v261
    %310 = vmatmul.bf16.gmra.mxu0 %v272
    %v311 = vpop.f32.mrf.mxu0
    %v312 = vadd.f32 0.0, %v311
    %v313 = vpop.f32.mrf.mxu0
    %v314 = vadd.f32 0.0, %v313
    %315 = vdwg.mxu0
    %316 = vmatpush.bf16.msra.mxu0 0
    %317 = vmatpush.bf16.msra.mxu0 0
    %318 = vmatpush.bf16.msra.mxu0 0
    %319 = vmatpush.bf16.msra.mxu0 0
    %320 = vmatpush.bf16.msra.mxu0 0
    %321 = vmatpush.bf16.msra.mxu0 0
    %322 = vmatpush.bf16.msra.mxu0 0
    %323 = vmatpush.bf16.msra.mxu0 %v262
    %324 = vmatmul.bf16.gmra.mxu0 %v272
    %v325 = vpop.f32.mrf.mxu0
    %v326 = vadd.f32 0.0, %v325
    %v327 = vpop.f32.mrf.mxu0
    %v328 = vadd.f32 0.0, %v327
    %329 = vdwg.mxu0
    %330 = vmatpush.bf16.msra.mxu0 0
    %331 = vmatpush.bf16.msra.mxu0 0
    %332 = vmatpush.bf16.msra.mxu0 0
    %333 = vmatpush.bf16.msra.mxu0 0
    %334 = vmatpush.bf16.msra.mxu0 0
    %335 = vmatpush.bf16.msra.mxu0 0
    %336 = vmatpush.bf16.msra.mxu0 0
    %337 = vmatpush.bf16.msra.mxu0 %v263
    %338 = vmatmul.bf16.gmra.mxu0 %v272
    %v339 = vpop.f32.mrf.mxu0
    %v340 = vadd.f32 0.0, %v339
    %v341 = vpop.f32.mrf.mxu0
    %v342 = vadd.f32 0.0, %v341
    %343 = vdwg.mxu0
    %344 = vmatpush.bf16.msra.mxu0 0
    %345 = vmatpush.bf16.msra.mxu0 0
    %346 = vmatpush.bf16.msra.mxu0 0
    %347 = vmatpush.bf16.msra.mxu0 0
    %348 = vmatpush.bf16.msra.mxu0 0
    %349 = vmatpush.bf16.msra.mxu0 0
    %350 = vmatpush.bf16.msra.mxu0 0
    %351 = vmatpush.bf16.msra.mxu0 %v264
    %352 = vmatmul.bf16.gmra.mxu0 %v272
    %v353 = vpop.f32.mrf.mxu0
    %v354 = vadd.f32 0.0, %v353
    %v355 = vpop.f32.mrf.mxu0
    %v356 = vadd.f32 0.0, %v355
    %357 = vdwg.mxu0
    %v358 = vrcp.pop %v326
    %v359 = vmul.f32 %v326, %v358
    %v360 = vsub.f32 1.0, %v359
    %v361 = vmul.f32 %v358, %v360
    %v362 = vadd.f32 %v358, %v361
    %vm363 = vweird.f32 %v326
    %vm364 = vweird.f32 %v358
    %vm365 = vmor %vm363, %vm364
    %v366 = vsel %vm365, %v358, %v362
    %v367 = vand.u32 2147483647, %v326
    %vm368 = vcmp.eq.f32.partialorder %v367, 8.507059e+37
    %v369 = vand.u32 %v326, 2147483648
    %v370 = vor.u32 1.1754944e-38, %v369
    %v371 = vsel %vm368, %v370, %v366
    %v372 = vmul.f32 %v284, %v371
    %v373 = vrcp.pop %v340
    %v374 = vmul.f32 %v340, %v373
    %v375 = vsub.f32 1.0, %v374
    %v376 = vmul.f32 %v373, %v375
    %v377 = vadd.f32 %v373, %v376
    %vm378 = vweird.f32 %v340
    %vm379 = vweird.f32 %v373
    %vm380 = vmor %vm378, %vm379
    %v381 = vsel %vm380, %v373, %v377
    %v382 = vand.u32 2147483647, %v340
    %vm383 = vcmp.eq.f32.partialorder %v382, 8.507059e+37
    %v384 = vand.u32 %v340, 2147483648
    %v385 = vor.u32 1.1754944e-38, %v384
    %v386 = vsel %vm383, %v385, %v381
    %v387 = vmul.f32 %v298, %v386
    %v388 = vrcp.pop %v354
    %v389 = vmul.f32 %v354, %v388
    %v390 = vsub.f32 1.0, %v389
    %v391 = vmul.f32 %v388, %v390
    %v392 = vadd.f32 %v388, %v391
    %vm393 = vweird.f32 %v354
    %vm394 = vweird.f32 %v388
    %vm395 = vmor %vm393, %vm394
    %v396 = vsel %vm395, %v388, %v392
    %v397 = vand.u32 2147483647, %v354
    %vm398 = vcmp.eq.f32.partialorder %v397, 8.507059e+37
    %v399 = vand.u32 %v354, 2147483648
    %v400 = vor.u32 1.1754944e-38, %v399
    %v401 = vsel %vm398, %v400, %v396
    %v402 = vmul.f32 %v312, %v401
    %v403 = vrcp.pop %v328
    %v404 = vmul.f32 %v328, %v403
    %v405 = vsub.f32 1.0, %v404
    %v406 = vmul.f32 %v403, %v405
    %v407 = vadd.f32 %v403, %v406
    %vm408 = vweird.f32 %v328
    %vm409 = vweird.f32 %v403
    %vm410 = vmor %vm408, %vm409
    %v411 = vsel %vm410, %v403, %v407
    %v412 = vand.u32 2147483647, %v328
    %vm413 = vcmp.eq.f32.partialorder %v412, 8.507059e+37
    %v414 = vand.u32 %v328, 2147483648
    %v415 = vor.u32 1.1754944e-38, %v414
    %v416 = vsel %vm413, %v415, %v411
    %v417 = vmul.f32 %v286, %v416
    %v418 = vrcp.pop %v342
    %v419 = vmul.f32 %v342, %v418
    %v420 = vsub.f32 1.0, %v419
    %v421 = vmul.f32 %v418, %v420
    %v422 = vadd.f32 %v418, %v421
    %vm423 = vweird.f32 %v342
    %vm424 = vweird.f32 %v418
    %vm425 = vmor %vm423, %vm424
    %v426 = vsel %vm425, %v418, %v422
    %v427 = vand.u32 2147483647, %v342
    %vm428 = vcmp.eq.f32.partialorder %v427, 8.507059e+37
    %v429 = vand.u32 %v342, 2147483648
    %v430 = vor.u32 1.1754944e-38, %v429
    %v431 = vsel %vm428, %v430, %v426
    %v432 = vmul.f32 %v300, %v431
    %v433 = vrcp.pop %v356
    %v434 = vmul.f32 %v356, %v433
    %v435 = vsub.f32 1.0, %v434
    %v436 = vmul.f32 %v433, %v435
    %v437 = vadd.f32 %v433, %v436
    %vm438 = vweird.f32 %v356
    %vm439 = vweird.f32 %v433
    %vm440 = vmor %vm438, %vm439
    %v441 = vsel %vm440, %v433, %v437
    %v442 = vand.u32 2147483647, %v356
    %vm443 = vcmp.eq.f32.partialorder %v442, 8.507059e+37
    %v444 = vand.u32 %v356, 2147483648
    %v445 = vor.u32 1.1754944e-38, %v444
    %v446 = vsel %vm443, %v445, %v441
    %v447 = vmul.f32 %v314, %v446
    %v448 = vmul.f32 %v372, %v215
    %v449 = vmul.f32 %v387, %v216
    %v450 = vmul.f32 %v402, %v217
    %v451 = vmul.f32 %v417, %v218
    %v452 = vmul.f32 %v432, %v219
    %v453 = vmul.f32 %v447, %v220
    %v454 = vpack.c.bf16 %v451, %v448
    %v455 = vpack.c.bf16 %v452, %v449
    %v456 = vpack.c.bf16 %v453, %v450
    %v457 = vld [vmem:[#allocation2] sm:$0xf]
    %v458 = vld [vmem:[#allocation2 + $0x4] sm:$0xf]
    %v459 = vld [vmem:[#allocation2 + $0x8] sm:$0xf]
    %v460 = vld [vmem:[#allocation2 + $0xc] sm:$0xf]
    %v461 = vld [vmem:[#allocation2 + $0x10] sm:$0xf]
    %v462 = vld [vmem:[#allocation2 + $0x14] sm:$0xf]
    %v463 = vld [vmem:[#allocation2 + $0x18] sm:$0xf]
    %v464 = vld [vmem:[#allocation2 + $0x1c] sm:$0xf]
    %v465 = vld [vmem:[#allocation2 + $0x20] sm:$0xf]
    %v466 = vld [vmem:[#allocation2 + $0x24] sm:$0xf]
    %v467 = vld [vmem:[#allocation2 + $0x28] sm:$0xf]
    %v468 = vld [vmem:[#allocation2 + $0x2c] sm:$0xf]
    %v469 = vld [vmem:[#allocation2 + $0x30] sm:$0xf]
    %v470 = vld [vmem:[#allocation2 + $0x34] sm:$0xf]
    %v471 = vld [vmem:[#allocation2 + $0x38] sm:$0xf]
    %v472 = vld [vmem:[#allocation2 + $0x3c] sm:$0xf]
    %v473 = vld [vmem:[#allocation2 + $0x40] sm:$0xf]
    %v474 = vld [vmem:[#allocation2 + $0x44] sm:$0xf]
    %v475 = vld [vmem:[#allocation2 + $0x48] sm:$0xf]
    %v476 = vld [vmem:[#allocation2 + $0x4c] sm:$0xf]
    %v477 = vld [vmem:[#allocation2 + $0x50] sm:$0xf]
    %v478 = vld [vmem:[#allocation2 + $0x54] sm:$0xf]
    %v479 = vld [vmem:[#allocation2 + $0x58] sm:$0xf]
    %v480 = vld [vmem:[#allocation2 + $0x5c] sm:$0xf]
    %v481 = vld [vmem:[#allocation2 + $0x60] sm:$0xf]
    %v482 = vld [vmem:[#allocation2 + $0x64] sm:$0xf]
    %v483 = vld [vmem:[#allocation2 + $0x68] sm:$0xf]
    %v484 = vld [vmem:[#allocation2 + $0x6c] sm:$0xf]
    %v485 = vld [vmem:[#allocation2 + $0x70] sm:$0xf]
    %v486 = vld [vmem:[#allocation2 + $0x74] sm:$0xf]
    %v487 = vld [vmem:[#allocation2 + $0x78] sm:$0xf]
    %v488 = vld [vmem:[#allocation2 + $0x7c] sm:$0xf]
    %v489 = vld [vmem:[#allocation2 + $0x80] sm:$0xf]
    %v490 = vld [vmem:[#allocation2 + $0x84] sm:$0xf]
    %v491 = vld [vmem:[#allocation2 + $0x88] sm:$0xf]
    %v492 = vld [vmem:[#allocation2 + $0x8c] sm:$0xf]
    %v493 = vld [vmem:[#allocation2 + $0x90] sm:$0xf]
    %v494 = vld [vmem:[#allocation2 + $0x94] sm:$0xf]
    %v495 = vld [vmem:[#allocation2 + $0x98] sm:$0xf]
    %v496 = vld [vmem:[#allocation2 + $0x9c] sm:$0xf]
    %v497 = vld [vmem:[%s5 + $0x4] sm:$0x1]
    %v499 = vperm.slane %v497, 0
    %v541 = vunpack.c.l.b16 %v457
    %v542 = vunpack.c.l.b16 %v458
    %v543 = vunpack.c.l.b16 %v459
    %v544 = vunpack.c.l.b16 %v460
    %v545 = vunpack.c.l.b16 %v461
    %v546 = vunpack.c.l.b16 %v462
    %v547 = vunpack.c.l.b16 %v463
    %v548 = vunpack.c.l.b16 %v464
    %v549 = vunpack.c.l.b16 %v465
    %v550 = vunpack.c.l.b16 %v466
    %v551 = vunpack.c.l.b16 %v467
    %v552 = vunpack.c.l.b16 %v468
    %v553 = vunpack.c.l.b16 %v469
    %v554 = vunpack.c.l.b16 %v470
    %v555 = vunpack.c.l.b16 %v471
    %v556 = vunpack.c.l.b16 %v472
    %v557 = vunpack.c.l.b16 %v473
    %v558 = vunpack.c.l.b16 %v474
    %v559 = vunpack.c.l.b16 %v475
    %v560 = vunpack.c.l.b16 %v476
    %v561 = vunpack.c.l.b16 %v477
    %v562 = vunpack.c.l.b16 %v478
    %v563 = vunpack.c.l.b16 %v479
    %v564 = vunpack.c.l.b16 %v480
    %v565 = vunpack.c.l.b16 %v481
    %v566 = vunpack.c.l.b16 %v482
    %v567 = vunpack.c.l.b16 %v483
    %v568 = vunpack.c.l.b16 %v484
    %v569 = vunpack.c.l.b16 %v485
    %v570 = vunpack.c.l.b16 %v486
    %v571 = vunpack.c.l.b16 %v487
    %v572 = vunpack.c.l.b16 %v488
    %v573 = vunpack.c.l.b16 %v489
    %v574 = vunpack.c.l.b16 %v490
    %v575 = vunpack.c.l.b16 %v491
    %v576 = vunpack.c.l.b16 %v492
    %v577 = vunpack.c.l.b16 %v493
    %v578 = vunpack.c.l.b16 %v494
    %v579 = vunpack.c.l.b16 %v495
    %v580 = vunpack.c.l.b16 %v496
    %v581 = vpack.c.b16 %v542, %v541
    %v582 = vpack.c.b16 %v544, %v543
    %v583 = vpack.c.b16 %v546, %v545
    %v584 = vpack.c.b16 %v548, %v547
    %v585 = vpack.c.b16 %v550, %v549
    %v586 = vpack.c.b16 %v552, %v551
    %v587 = vpack.c.b16 %v554, %v553
    %v588 = vpack.c.b16 %v556, %v555
    %v589 = vpack.c.b16 %v558, %v557
    %v590 = vpack.c.b16 %v560, %v559
    %v591 = vpack.c.b16 %v562, %v561
    %v592 = vpack.c.b16 %v564, %v563
    %v593 = vpack.c.b16 %v566, %v565
    %v594 = vpack.c.b16 %v568, %v567
    %v595 = vpack.c.b16 %v570, %v569
    %v596 = vpack.c.b16 %v572, %v571
    %v597 = vpack.c.b16 %v574, %v573
    %v598 = vpack.c.b16 %v576, %v575
    %v599 = vpack.c.b16 %v578, %v577
    %v600 = vpack.c.b16 %v580, %v579
    %v622 = vsel %vm155, %v456, 0
    %624 = vmatpush.bf16.msra.mxu0 %v588
    %625 = vmatpush.bf16.msra.mxu0 %v587
    %626 = vmatpush.bf16.msra.mxu0 %v586
    %627 = vmatpush.bf16.msra.mxu0 %v585
    %628 = vmatpush.bf16.msra.mxu0 %v584
    %629 = vmatpush.bf16.msra.mxu0 %v583
    %630 = vmatpush.bf16.msra.mxu0 %v582
    %631 = vmatpush.bf16.msra.mxu0 %v581
    %632 = vmatmul.bf16.gmra.mxu0 %v454
    %v633 = vpop.f32.mrf.mxu0
    %v634 = vadd.f32 %v499, %v633
    %v635 = vpop.f32.mrf.mxu0
    %v636 = vadd.f32 %v499, %v635
    %637 = vdwg.mxu0
    %638 = vmatpush.bf16.msra.mxu0 %v596
    %639 = vmatpush.bf16.msra.mxu0 %v595
    %640 = vmatpush.bf16.msra.mxu0 %v594
    %641 = vmatpush.bf16.msra.mxu0 %v593
    %642 = vmatpush.bf16.msra.mxu0 %v592
    %643 = vmatpush.bf16.msra.mxu0 %v591
    %644 = vmatpush.bf16.msra.mxu0 %v590
    %645 = vmatpush.bf16.msra.mxu0 %v589
    %646 = vmatmul.bf16.gmra.mxu0 %v455
    %v647 = vpop.f32.mrf.mxu0
    %v648 = vadd.f32 %v634, %v647
    %v649 = vpop.f32.mrf.mxu0
    %v650 = vadd.f32 %v636, %v649
    %651 = vdwg.mxu0
    %652 = vmatpush.bf16.msra.mxu0 0
    %653 = vmatpush.bf16.msra.mxu0 0
    %654 = vmatpush.bf16.msra.mxu0 0
    %655 = vmatpush.bf16.msra.mxu0 0
    %656 = vmatpush.bf16.msra.mxu0 %v600
    %657 = vmatpush.bf16.msra.mxu0 %v599
    %658 = vmatpush.bf16.msra.mxu0 %v598
    %659 = vmatpush.bf16.msra.mxu0 %v597
    %660 = vmatmul.bf16.gmra.mxu0 %v622
    %v661 = vpop.f32.mrf.mxu0
    %v662 = vadd.f32 %v648, %v661
    %v663 = vpop.f32.mrf.mxu0
    %v664 = vadd.f32 %v650, %v663
    %665 = vdwg.mxu0
    %v666 = vmax.f32 %v662, 0.0
    %v667 = vmax.f32 %v664, 0.0
    %v668 = vpack.c.bf16 %v667, %v666
    %v669 = vld [vmem:[#allocation2 + $0xa0] sm:$0xf]
    %v670 = vld [vmem:[#allocation2 + $0xa4] sm:$0xf]
    %v671 = vld [vmem:[#allocation2 + $0xa8] sm:$0xf]
    %v672 = vld [vmem:[#allocation2 + $0xac] sm:$0xf]
    %v673 = vld [vmem:[%s5 + $0x5] sm:$0x1]
    %v675 = vperm.slane %v673, 0
    %v681 = vunpack.c.l.b16 %v669
    %v682 = vunpack.c.l.b16 %v670
    %v683 = vunpack.c.l.b16 %v671
    %v684 = vunpack.c.l.b16 %v672
    %v685 = vpack.c.b16 %v682, %v681
    %v686 = vpack.c.b16 %v684, %v683
    %vm689 = vcmask 261120
    %v691 = vsel %vm689, %v668, 0
    %693 = vmatpush.bf16.msra.mxu0 0
    %694 = vmatpush.bf16.msra.mxu0 0
    %695 = vmatpush.bf16.msra.mxu0 0
    %696 = vmatpush.bf16.msra.mxu0 0
    %697 = vmatpush.bf16.msra.mxu0 0
    %698 = vmatpush.bf16.msra.mxu0 0
    %699 = vmatpush.bf16.msra.mxu0 %v686
    %700 = vmatpush.bf16.msra.mxu0 %v685
    %701 = vmatmul.bf16.gmra.mxu0 %v691
    %v702 = vpop.f32.mrf.mxu0
    %v703 = vadd.f32 %v675, %v702
    %v704 = vpop.f32.mrf.mxu0
    %v705 = vadd.f32 %v675, %v704
    %706 = vdwg.mxu0
    %v707 = vxor.u32 %v703, 2147483648
    %v708 = vxor.u32 %v705, 2147483648
    %v709 = vmul.f32 %v707, 1.442695
    %v710 = vpow.pop %v709
    %v711 = vmul.f32 %v708, 1.442695
    %v712 = vpow.pop %v711
    %v713 = vadd.f32 %v710, 1.0
    %v714 = vadd.f32 %v712, 1.0
    %v715 = vrcp.pop %v713
    %v716 = vmul.f32 %v713, %v715
    %v717 = vsub.f32 1.0, %v716
    %v718 = vmul.f32 %v715, %v717
    %v719 = vadd.f32 %v715, %v718
    %vm720 = vweird.f32 %v713
    %vm721 = vweird.f32 %v715
    %vm722 = vmor %vm720, %vm721
    %v723 = vsel %vm722, %v715, %v719
    %v724 = vand.u32 2147483647, %v713
    %vm725 = vcmp.eq.f32.partialorder %v724, 8.507059e+37
    %v726 = vand.u32 %v713, 2147483648
    %v727 = vor.u32 1.1754944e-38, %v726
    %v728 = vsel %vm725, %v727, %v723
    %v729 = vmul.f32 1.0, %v728
    %v730 = vrcp.pop %v714
    %v731 = vmul.f32 %v714, %v730
    %v732 = vsub.f32 1.0, %v731
    %v733 = vmul.f32 %v730, %v732
    %v734 = vadd.f32 %v730, %v733
    %vm735 = vweird.f32 %v714
    %vm736 = vweird.f32 %v730
    %vm737 = vmor %vm735, %vm736
    %v738 = vsel %vm737, %v730, %v734
    %v739 = vand.u32 2147483647, %v714
    %vm740 = vcmp.eq.f32.partialorder %v739, 8.507059e+37
    %v741 = vand.u32 %v714, 2147483648
    %v742 = vor.u32 1.1754944e-38, %v741
    %v743 = vsel %vm740, %v742, %v738
    %v744 = vmul.f32 1.0, %v743
    %vm745 = vcmp.eq.s32.totalorder %v42, 1
    %vm746 = vcmp.eq.s32.totalorder %v43, 1
    %749 = vrot.lane.b32.xlu0 %v729, 127
    %v750 = vpop.permute.xlu0 %749
    %751 = vrot.lane.b32.xlu0 %v744, 127
    %v752 = vpop.permute.xlu0 %751
    %v755 = vsel %vm745, %v750, %v729
    %v756 = vsel %vm746, %v752, %v744
    %vm757 = vcmask 7168
    %758 = vst.msk [vmem:[%s6] sm:$0xff] %vm757, %v755
    %759 = vst.msk [vmem:[%s6 + $0x8] sm:$0xff] %vm757, %v756
    // Predicated region
    $region30: #{forward.1} parent=1 // pred_check
      _
    $region31: #{forward.1} parent=1 // pred_check_branch
      %761 = sbr.rel (0) target = $region33
    $region32: #{forward.1} parent=1 // pred_region
      _
    $region33: #{forward.1} parent=1 // pred_fallthru
      _
    // Predicated region
    $region34: #{forward.1} parent=1 // pred_check
      _
    $region35: #{forward.1} parent=1 // pred_check_branch
      %763 = sbr.rel (0) target = $region37
    $region36: #{forward.1} parent=1 // pred_region
      _
    $region37: #{forward.1} parent=1 // pred_fallthru
      _
    %764 = vsyncpa [#allocation3], 1

</llo_original>
